<compile_context>
chip_gen: v6e
topology: v6e:2x2x1
jax: 0.10.0
libtpu: 0.0.40
codegen_flags: <defaults>
</compile_context>

<pallas_src>
import jax
import jax.numpy as jnp
from jax.experimental import pallas as pl
from jax.experimental.pallas import tpu as pltpu

# ---------------- problem sizes (small, consistent with the module) ---------
B = 2          # batch
C_IN = 4       # input channels
H = W = 16     # spatial
HW = H * W
C_MID = 8      # target-layer channels
NUM_CLASSES = 10
LANES = 128    # class axis padded to a full lane width for dense stores


def gradcampp_kernel(tgt_ref,                               # SMEM (B,) int32
                     x_ref, wc_ref, bc_ref, wft_ref, bf_ref,  # inputs
                     cam_ref, prob_ref):                    # outputs
    wc = wc_ref[...]            # (C_MID, C_IN)
    bc = bc_ref[...]            # (C_MID, 1)
    wft = wft_ref[...]          # (C_MID, LANES)  = wf.T zero-padded in lanes
    bf = bf_ref[...]            # (1, LANES)      = bf zero-padded in lanes

    lane = jax.lax.broadcasted_iota(jnp.int32, (1, LANES), 1)
    valid = lane < NUM_CLASSES                               # (1, LANES)

    for b in range(B):                                       # static unroll
        t = tgt_ref[b]                                       # SMEM scalar
        xb = x_ref[b]                                        # (C_IN, HW)

        # ---- backbone forward: 1x1 conv unrolled on the VPU -----------------
        A = bc + wc[:, 0:1] * xb[0:1, :]
        for c in range(1, C_IN):
            A = A + wc[:, c:c + 1] * xb[c:c + 1, :]          # (C_MID, HW)

        R = jnp.maximum(A, 0.0)
        pooled = jnp.mean(R, axis=1, keepdims=True)          # (C_MID, 1)

        # logits: VPU multiply + sublane reduce (no MXU, no transpose)
        logits = jnp.sum(pooled * wft, axis=0, keepdims=True) + bf   # (1, LANES)
        logits = jnp.where(valid, logits, -1e30)             # mask padded lanes

        # softmax(model_outputs, dim=-1); padded lanes -> exp(-1e30) = 0
        m = jnp.max(logits, axis=-1, keepdims=True)
        e = jnp.exp(logits - m)
        probs = e / jnp.sum(e, axis=-1, keepdims=True)       # (1, LANES)

        # ---- analytic gradient of logits[t] w.r.t. A ------------------------
        # select column t of wft (== row t of wf) via VPU select + lane reduce
        sel = (lane == t).astype(jnp.float32)                # (1, LANES)
        wf_t = jnp.sum(wft * sel, axis=1, keepdims=True)     # (C_MID, 1)
        g = (wf_t * (1.0 / HW)) * (A > 0.0).astype(jnp.float32)   # (C_MID, HW)

        # ---- GradCAM++ weights ----------------------------------------------
        g2 = g * g
        g3 = g2 * g
        sum_act = jnp.sum(A, axis=1, keepdims=True)          # (C_MID, 1)
        aij = g2 / (2.0 * g2 + sum_act * g3 + 1e-6)
        aij = jnp.where(g != 0.0, aij, 0.0)
        w = jnp.sum(jnp.maximum(g, 0.0) * aij, axis=1, keepdims=True)  # (C_MID, 1)

        # ---- CAM image + per-image normalization (applied twice, as in lib) --
        cam = jnp.sum(w * A, axis=0, keepdims=True)          # (1, HW)
        cam = jnp.maximum(cam, 0.0)
        cam = cam - jnp.min(cam, axis=-1, keepdims=True)
        cam = cam / (1e-7 + jnp.max(cam, axis=-1, keepdims=True))
        cam = jnp.maximum(cam, 0.0)
        cam = cam - jnp.min(cam, axis=-1, keepdims=True)
        cam = cam / (1e-7 + jnp.max(cam, axis=-1, keepdims=True))

        cam_ref[b:b + 1, :] = cam                            # 256-lane dense row
        prob_ref[b:b + 1, :] = probs                         # 128-lane dense row


def gradcampp_forward(x_nchw, targets, wc, bc, wf, bf):
    """x_nchw: (B, C_IN, H, W) f32; targets: (B,) int32; wf: (NUM_CLASSES, C_MID)."""
    x2d = x_nchw.reshape(B, C_IN, HW).astype(jnp.float32)

    # host-side (free): pre-transpose wf and pad class axis to 128 lanes
    wft_pad = jnp.zeros((C_MID, LANES), jnp.float32).at[:, :NUM_CLASSES].set(wf.T)
    bf_pad = jnp.zeros((1, LANES), jnp.float32).at[:, :NUM_CLASSES].set(
        bf.reshape(1, NUM_CLASSES))

    grid_spec = pltpu.PrefetchScalarGridSpec(
        num_scalar_prefetch=1,
        grid=(1,),                                    # whole batch in one step
        in_specs=[
            pl.BlockSpec((B, C_IN, HW), lambda i, tgt: (0, 0, 0)),
            pl.BlockSpec((C_MID, C_IN), lambda i, tgt: (0, 0)),
            pl.BlockSpec((C_MID, 1), lambda i, tgt: (0, 0)),
            pl.BlockSpec((C_MID, LANES), lambda i, tgt: (0, 0)),
            pl.BlockSpec((1, LANES), lambda i, tgt: (0, 0)),
        ],
        out_specs=[
            pl.BlockSpec((B, HW), lambda i, tgt: (0, 0)),      # full-array, lane-dense
            pl.BlockSpec((B, LANES), lambda i, tgt: (0, 0)),   # full-array, lane-dense
        ],
    )

    cam_flat, probs_pad = pl.pallas_call(
        gradcampp_kernel,
        grid_spec=grid_spec,
        out_shape=(
            jax.ShapeDtypeStruct((B, HW), jnp.float32),
            jax.ShapeDtypeStruct((B, LANES), jnp.float32),
        ),
        compiler_params=pltpu.CompilerParams(
            dimension_semantics=("arbitrary",)),
    )(targets.astype(jnp.int32), x2d, wc, bc, wft_pad, bf_pad)

    grayscale_cam = cam_flat.reshape(B, 1, H, W)      # torch .unsqueeze(1)
    probs = probs_pad[:, :NUM_CLASSES]                # drop lane padding
    return grayscale_cam, probs


def reference_forward(x_nchw, targets, wc, bc, wf, bf):
    """Pure-JAX reference of the same GradCAM++ math (for validation)."""
    x2d = x_nchw.reshape(B, C_IN, HW)
    A = jnp.einsum("mc,bch->bmh", wc, x2d) + bc[None]              # (B, C_MID, HW)
    R = jnp.maximum(A, 0.0)
    pooled = jnp.mean(R, axis=2)                                   # (B, C_MID)
    logits = pooled @ wf.T + bf                                    # (B, NUM_CLASSES)
    probs = jax.nn.softmax(logits, axis=-1)

    wf_t = wf[targets]                                             # (B, C_MID)
    g = (wf_t[:, :, None] / HW) * (A > 0.0)
    g2, g3 = g * g, g * g * g
    sum_act = jnp.sum(A, axis=2, keepdims=True)
    aij = g2 / (2.0 * g2 + sum_act * g3 + 1e-6)
    aij = jnp.where(g != 0.0, aij, 0.0)
    wts = jnp.sum(jnp.maximum(g, 0.0) * aij, axis=2)               # (B, C_MID)
    cam = jnp.maximum(jnp.sum(wts[:, :, None] * A, axis=1), 0.0)   # (B, HW)
    cam = cam - jnp.min(cam, axis=-1, keepdims=True)
    cam = cam / (1e-7 + jnp.max(cam, axis=-1, keepdims=True))
    cam = jnp.maximum(cam, 0.0)
    cam = cam - jnp.min(cam, axis=-1, keepdims=True)
    cam = cam / (1e-7 + jnp.max(cam, axis=-1, keepdims=True))
    return cam.reshape(B, 1, H, W), probs


if __name__ == "__main__":
    key = jax.random.PRNGKey(0)
    kx, kwc, kbc, kwf, kbf = jax.random.split(key, 5)

    x = jax.random.normal(kx, (B, C_IN, H, W), dtype=jnp.float32)
    targets = jnp.array([1, 3], dtype=jnp.int32)

    # deterministic synthetic backbone parameters
    wc = 0.2 * jax.random.normal(kwc, (C_MID, C_IN), dtype=jnp.float32)   # 1x1 conv
    bc = 0.1 * jax.random.normal(kbc, (C_MID, 1), dtype=jnp.float32)
    wf = 0.2 * jax.random.normal(kwf, (NUM_CLASSES, C_MID), dtype=jnp.float32)
    bf = 0.1 * jax.random.normal(kbf, (1, NUM_CLASSES), dtype=jnp.float32)

    cam, probs = gradcampp_forward(x, targets, wc, bc, wf, bf)
    jax.block_until_ready((cam, probs))

    cam_ref, probs_ref = reference_forward(x, targets, wc, bc, wf, bf.reshape(-1))
    assert cam.shape == (B, 1, H, W) and probs.shape == (B, NUM_CLASSES)
    assert jnp.allclose(cam, cam_ref, rtol=1e-4, atol=1e-4)
    assert jnp.allclose(probs, probs_ref, rtol=1e-4, atol=1e-4)

    print("KERNEL_OK")
</pallas_src>

<mosaic_0001>
module attributes {stable_mosaic.version = 11 : i64} {
  func.func @gradcampp_kernel(%arg0: i32, %arg1: memref<2xi32, #tpu.memory_space<smem>>, %arg2: memref<2x4x256xf32, #tpu.memory_space<vmem>>, %arg3: memref<8x4xf32, #tpu.memory_space<vmem>>, %arg4: memref<8x1xf32, #tpu.memory_space<vmem>>, %arg5: memref<8x128xf32, #tpu.memory_space<vmem>>, %arg6: memref<1x128xf32, #tpu.memory_space<vmem>>, %arg7: memref<2x256xf32, #tpu.memory_space<vmem>>, %arg8: memref<2x128xf32, #tpu.memory_space<vmem>>) attributes {dimension_semantics = [#tpu.dimension_semantics<arbitrary>], iteration_bounds = array<i64: 1>, scalar_prefetch = 1 : i64, scratch_operands = 0 : i64, tpu.core_type = #tpu.core_type<tc>, window_params = [{pipeline_mode = #tpu.pipeline_mode<synchronous>, transform_indices = @transform_0, window_bounds = array<i64: 2, 4, 256>}, {pipeline_mode = #tpu.pipeline_mode<synchronous>, transform_indices = @transform_1, window_bounds = array<i64: 8, 4>}, {pipeline_mode = #tpu.pipeline_mode<synchronous>, transform_indices = @transform_2, window_bounds = array<i64: 8, 1>}, {pipeline_mode = #tpu.pipeline_mode<synchronous>, transform_indices = @transform_3, window_bounds = array<i64: 8, 128>}, {pipeline_mode = #tpu.pipeline_mode<synchronous>, transform_indices = @transform_4, window_bounds = array<i64: 1, 128>}, {pipeline_mode = #tpu.pipeline_mode<synchronous>, transform_indices = @transform_5, window_bounds = array<i64: 2, 256>}, {pipeline_mode = #tpu.pipeline_mode<synchronous>, transform_indices = @transform_6, window_bounds = array<i64: 2, 128>}]} {
    %c0 = arith.constant 0 : index
    %c0_0 = arith.constant 0 : index
    %0 = vector.load %arg3[%c0, %c0_0] : memref<8x4xf32, #tpu.memory_space<vmem>>, vector<8x4xf32>
    %c0_1 = arith.constant 0 : index
    %c0_2 = arith.constant 0 : index
    %1 = vector.load %arg4[%c0_1, %c0_2] : memref<8x1xf32, #tpu.memory_space<vmem>>, vector<8x1xf32>
    %c0_3 = arith.constant 0 : index
    %c0_4 = arith.constant 0 : index
    %2 = vector.load %arg5[%c0_3, %c0_4] : memref<8x128xf32, #tpu.memory_space<vmem>>, vector<8x128xf32>
    %c0_5 = arith.constant 0 : index
    %c0_6 = arith.constant 0 : index
    %3 = vector.load %arg6[%c0_5, %c0_6] : memref<1x128xf32, #tpu.memory_space<vmem>>, vector<1x128xf32>
    %4 = tpu.iota {dimensions = array<i32: 1>} : vector<1x128xi32>
    %c10_i32 = arith.constant 10 : i32
    %5 = vector.broadcast %c10_i32 : i32 to vector<1x128xi32>
    %6 = arith.cmpi slt, %4, %5 : vector<1x128xi32>
    %c0_7 = arith.constant 0 : index
    %7 = memref.load %arg1[%c0_7] : memref<2xi32, #tpu.memory_space<smem>>
    %c0_8 = arith.constant 0 : index
    %c0_9 = arith.constant 0 : index
    %c0_10 = arith.constant 0 : index
    %8 = vector.load %arg2[%c0_8, %c0_9, %c0_10] : memref<2x4x256xf32, #tpu.memory_space<vmem>>, vector<1x4x256xf32>
    %9 = vector.shape_cast %8 : vector<1x4x256xf32> to vector<4x256xf32>
    %10 = vector.extract_strided_slice %0 {offsets = [0, 0], sizes = [8, 1], strides = [1, 1]} : vector<8x4xf32> to vector<8x1xf32>
    %11 = vector.extract_strided_slice %9 {offsets = [0, 0], sizes = [1, 256], strides = [1, 1]} : vector<4x256xf32> to vector<1x256xf32>
    %12 = vector.broadcast %10 : vector<8x1xf32> to vector<8x256xf32>
    %13 = vector.broadcast %11 : vector<1x256xf32> to vector<8x256xf32>
    %14 = arith.mulf %12, %13 : vector<8x256xf32>
    %15 = vector.broadcast %1 : vector<8x1xf32> to vector<8x256xf32>
    %16 = arith.addf %15, %14 : vector<8x256xf32>
    %17 = vector.extract_strided_slice %0 {offsets = [0, 1], sizes = [8, 1], strides = [1, 1]} : vector<8x4xf32> to vector<8x1xf32>
    %18 = vector.extract_strided_slice %9 {offsets = [1, 0], sizes = [1, 256], strides = [1, 1]} : vector<4x256xf32> to vector<1x256xf32>
    %19 = vector.broadcast %17 : vector<8x1xf32> to vector<8x256xf32>
    %20 = vector.broadcast %18 : vector<1x256xf32> to vector<8x256xf32>
    %21 = arith.mulf %19, %20 : vector<8x256xf32>
    %22 = arith.addf %16, %21 : vector<8x256xf32>
    %23 = vector.extract_strided_slice %0 {offsets = [0, 2], sizes = [8, 1], strides = [1, 1]} : vector<8x4xf32> to vector<8x1xf32>
    %24 = vector.extract_strided_slice %9 {offsets = [2, 0], sizes = [1, 256], strides = [1, 1]} : vector<4x256xf32> to vector<1x256xf32>
    %25 = vector.broadcast %23 : vector<8x1xf32> to vector<8x256xf32>
    %26 = vector.broadcast %24 : vector<1x256xf32> to vector<8x256xf32>
    %27 = arith.mulf %25, %26 : vector<8x256xf32>
    %28 = arith.addf %22, %27 : vector<8x256xf32>
    %29 = vector.extract_strided_slice %0 {offsets = [0, 3], sizes = [8, 1], strides = [1, 1]} : vector<8x4xf32> to vector<8x1xf32>
    %30 = vector.extract_strided_slice %9 {offsets = [3, 0], sizes = [1, 256], strides = [1, 1]} : vector<4x256xf32> to vector<1x256xf32>
    %31 = vector.broadcast %29 : vector<8x1xf32> to vector<8x256xf32>
    %32 = vector.broadcast %30 : vector<1x256xf32> to vector<8x256xf32>
    %33 = arith.mulf %31, %32 : vector<8x256xf32>
    %34 = arith.addf %28, %33 : vector<8x256xf32>
    %cst = arith.constant 0.000000e+00 : f32
    %35 = vector.broadcast %cst : f32 to vector<8x256xf32>
    %36 = arith.maximumf %34, %35 : vector<8x256xf32>
    %cst_11 = arith.constant dense<0.000000e+00> : vector<8xf32>
    %37 = vector.multi_reduction <add>, %36, %cst_11 [1] : vector<8x256xf32> to vector<8xf32>
    %38 = vector.shape_cast %37 : vector<8xf32> to vector<8x1xf32>
    %cst_12 = arith.constant 2.560000e+02 : f32
    %39 = vector.broadcast %cst_12 : f32 to vector<8x1xf32>
    %40 = arith.divf %38, %39 : vector<8x1xf32>
    %41 = vector.broadcast %40 : vector<8x1xf32> to vector<8x128xf32>
    %42 = arith.mulf %41, %2 : vector<8x128xf32>
    %cst_13 = arith.constant dense<0.000000e+00> : vector<128xf32>
    %43 = vector.multi_reduction <add>, %42, %cst_13 [0] : vector<8x128xf32> to vector<128xf32>
    %44 = vector.shape_cast %43 : vector<128xf32> to vector<1x128xf32>
    %45 = arith.addf %44, %3 : vector<1x128xf32>
    %cst_14 = arith.constant -1.000000e+30 : f32
    %46 = vector.broadcast %cst_14 : f32 to vector<1x128xf32>
    %47 = arith.select %6, %45, %46 : vector<1x128xi1>, vector<1x128xf32>
    %cst_15 = arith.constant dense<0xFF800000> : vector<1xf32>
    %48 = vector.multi_reduction <maximumf>, %47, %cst_15 [1] : vector<1x128xf32> to vector<1xf32>
    %49 = vector.shape_cast %48 : vector<1xf32> to vector<1x1xf32>
    %50 = vector.broadcast %49 : vector<1x1xf32> to vector<1x128xf32>
    %51 = arith.subf %47, %50 : vector<1x128xf32>
    %52 = math.exp %51 : vector<1x128xf32>
    %cst_16 = arith.constant dense<0.000000e+00> : vector<1xf32>
    %53 = vector.multi_reduction <add>, %52, %cst_16 [1] : vector<1x128xf32> to vector<1xf32>
    %54 = vector.shape_cast %53 : vector<1xf32> to vector<1x1xf32>
    %55 = vector.broadcast %54 : vector<1x1xf32> to vector<1x128xf32>
    %56 = arith.divf %52, %55 : vector<1x128xf32>
    %57 = vector.broadcast %7 : i32 to vector<1x128xi32>
    %58 = arith.cmpi eq, %4, %57 : vector<1x128xi32>
    %59 = arith.extui %58 : vector<1x128xi1> to vector<1x128xi32>
    %60 = arith.sitofp %59 : vector<1x128xi32> to vector<1x128xf32>
    %61 = vector.broadcast %60 : vector<1x128xf32> to vector<8x128xf32>
    %62 = arith.mulf %2, %61 : vector<8x128xf32>
    %cst_17 = arith.constant dense<0.000000e+00> : vector<8xf32>
    %63 = vector.multi_reduction <add>, %62, %cst_17 [1] : vector<8x128xf32> to vector<8xf32>
    %64 = vector.shape_cast %63 : vector<8xf32> to vector<8x1xf32>
    %cst_18 = arith.constant 3.906250e-03 : f32
    %65 = vector.broadcast %cst_18 : f32 to vector<8x1xf32>
    %66 = arith.mulf %64, %65 : vector<8x1xf32>
    %cst_19 = arith.constant 0.000000e+00 : f32
    %67 = vector.broadcast %cst_19 : f32 to vector<8x256xf32>
    %68 = arith.cmpf ogt, %34, %67 : vector<8x256xf32>
    %69 = arith.extui %68 : vector<8x256xi1> to vector<8x256xi32>
    %70 = arith.sitofp %69 : vector<8x256xi32> to vector<8x256xf32>
    %71 = vector.broadcast %66 : vector<8x1xf32> to vector<8x256xf32>
    %72 = arith.mulf %71, %70 : vector<8x256xf32>
    %73 = arith.mulf %72, %72 : vector<8x256xf32>
    %74 = arith.mulf %73, %72 : vector<8x256xf32>
    %cst_20 = arith.constant dense<0.000000e+00> : vector<8xf32>
    %75 = vector.multi_reduction <add>, %34, %cst_20 [1] : vector<8x256xf32> to vector<8xf32>
    %76 = vector.shape_cast %75 : vector<8xf32> to vector<8x1xf32>
    %cst_21 = arith.constant 2.000000e+00 : f32
    %77 = vector.broadcast %cst_21 : f32 to vector<8x256xf32>
    %78 = arith.mulf %77, %73 : vector<8x256xf32>
    %79 = vector.broadcast %76 : vector<8x1xf32> to vector<8x256xf32>
    %80 = arith.mulf %79, %74 : vector<8x256xf32>
    %81 = arith.addf %78, %80 : vector<8x256xf32>
    %cst_22 = arith.constant 9.99999997E-7 : f32
    %82 = vector.broadcast %cst_22 : f32 to vector<8x256xf32>
    %83 = arith.addf %81, %82 : vector<8x256xf32>
    %84 = arith.divf %73, %83 : vector<8x256xf32>
    %cst_23 = arith.constant 0.000000e+00 : f32
    %85 = vector.broadcast %cst_23 : f32 to vector<8x256xf32>
    %86 = arith.cmpf one, %72, %85 : vector<8x256xf32>
    %cst_24 = arith.constant 0.000000e+00 : f32
    %87 = vector.broadcast %cst_24 : f32 to vector<8x256xf32>
    %88 = arith.select %86, %84, %87 : vector<8x256xi1>, vector<8x256xf32>
    %cst_25 = arith.constant 0.000000e+00 : f32
    %89 = vector.broadcast %cst_25 : f32 to vector<8x256xf32>
    %90 = arith.maximumf %72, %89 : vector<8x256xf32>
    %91 = arith.mulf %90, %88 : vector<8x256xf32>
    %cst_26 = arith.constant dense<0.000000e+00> : vector<8xf32>
    %92 = vector.multi_reduction <add>, %91, %cst_26 [1] : vector<8x256xf32> to vector<8xf32>
    %93 = vector.shape_cast %92 : vector<8xf32> to vector<8x1xf32>
    %94 = vector.broadcast %93 : vector<8x1xf32> to vector<8x256xf32>
    %95 = arith.mulf %94, %34 : vector<8x256xf32>
    %cst_27 = arith.constant dense<0.000000e+00> : vector<256xf32>
    %96 = vector.multi_reduction <add>, %95, %cst_27 [0] : vector<8x256xf32> to vector<256xf32>
    %97 = vector.shape_cast %96 : vector<256xf32> to vector<1x256xf32>
    %cst_28 = arith.constant 0.000000e+00 : f32
    %98 = vector.broadcast %cst_28 : f32 to vector<1x256xf32>
    %99 = arith.maximumf %97, %98 : vector<1x256xf32>
    %cst_29 = arith.constant dense<0x7F800000> : vector<1xf32>
    %100 = vector.multi_reduction <minimumf>, %99, %cst_29 [1] : vector<1x256xf32> to vector<1xf32>
    %101 = vector.shape_cast %100 : vector<1xf32> to vector<1x1xf32>
    %102 = vector.broadcast %101 : vector<1x1xf32> to vector<1x256xf32>
    %103 = arith.subf %99, %102 : vector<1x256xf32>
    %cst_30 = arith.constant dense<0xFF800000> : vector<1xf32>
    %104 = vector.multi_reduction <maximumf>, %103, %cst_30 [1] : vector<1x256xf32> to vector<1xf32>
    %105 = vector.shape_cast %104 : vector<1xf32> to vector<1x1xf32>
    %cst_31 = arith.constant 1.000000e-07 : f32
    %106 = vector.broadcast %cst_31 : f32 to vector<1x1xf32>
    %107 = arith.addf %106, %105 : vector<1x1xf32>
    %108 = vector.broadcast %107 : vector<1x1xf32> to vector<1x256xf32>
    %109 = arith.divf %103, %108 : vector<1x256xf32>
    %cst_32 = arith.constant 0.000000e+00 : f32
    %110 = vector.broadcast %cst_32 : f32 to vector<1x256xf32>
    %111 = arith.maximumf %109, %110 : vector<1x256xf32>
    %cst_33 = arith.constant dense<0x7F800000> : vector<1xf32>
    %112 = vector.multi_reduction <minimumf>, %111, %cst_33 [1] : vector<1x256xf32> to vector<1xf32>
    %113 = vector.shape_cast %112 : vector<1xf32> to vector<1x1xf32>
    %114 = vector.broadcast %113 : vector<1x1xf32> to vector<1x256xf32>
    %115 = arith.subf %111, %114 : vector<1x256xf32>
    %cst_34 = arith.constant dense<0xFF800000> : vector<1xf32>
    %116 = vector.multi_reduction <maximumf>, %115, %cst_34 [1] : vector<1x256xf32> to vector<1xf32>
    %117 = vector.shape_cast %116 : vector<1xf32> to vector<1x1xf32>
    %cst_35 = arith.constant 1.000000e-07 : f32
    %118 = vector.broadcast %cst_35 : f32 to vector<1x1xf32>
    %119 = arith.addf %118, %117 : vector<1x1xf32>
    %120 = vector.broadcast %119 : vector<1x1xf32> to vector<1x256xf32>
    %121 = arith.divf %115, %120 : vector<1x256xf32>
    %c0_36 = arith.constant 0 : index
    %c0_37 = arith.constant 0 : index
    %122 = vector.load %arg7[%c0_36, %c0_37] : memref<2x256xf32, #tpu.memory_space<vmem>>, vector<1x256xf32>
    tpu.vector_store %arg7[%c0_36, %c0_37], %121 {strides = array<i32>} : memref<2x256xf32, #tpu.memory_space<vmem>>, vector<1x256xf32>,
    %c0_38 = arith.constant 0 : index
    %c0_39 = arith.constant 0 : index
    %123 = vector.load %arg8[%c0_38, %c0_39] : memref<2x128xf32, #tpu.memory_space<vmem>>, vector<1x128xf32>
    tpu.vector_store %arg8[%c0_38, %c0_39], %56 {strides = array<i32>} : memref<2x128xf32, #tpu.memory_space<vmem>>, vector<1x128xf32>,
    %c1 = arith.constant 1 : index
    %124 = memref.load %arg1[%c1] : memref<2xi32, #tpu.memory_space<smem>>
    %c1_40 = arith.constant 1 : index
    %c0_41 = arith.constant 0 : index
    %c0_42 = arith.constant 0 : index
    %125 = vector.load %arg2[%c1_40, %c0_41, %c0_42] : memref<2x4x256xf32, #tpu.memory_space<vmem>>, vector<1x4x256xf32>
    %126 = vector.shape_cast %125 : vector<1x4x256xf32> to vector<4x256xf32>
    %127 = vector.extract_strided_slice %0 {offsets = [0, 0], sizes = [8, 1], strides = [1, 1]} : vector<8x4xf32> to vector<8x1xf32>
    %128 = vector.extract_strided_slice %126 {offsets = [0, 0], sizes = [1, 256], strides = [1, 1]} : vector<4x256xf32> to vector<1x256xf32>
    %129 = vector.broadcast %127 : vector<8x1xf32> to vector<8x256xf32>
    %130 = vector.broadcast %128 : vector<1x256xf32> to vector<8x256xf32>
    %131 = arith.mulf %129, %130 : vector<8x256xf32>
    %132 = vector.broadcast %1 : vector<8x1xf32> to vector<8x256xf32>
    %133 = arith.addf %132, %131 : vector<8x256xf32>
    %134 = vector.extract_strided_slice %0 {offsets = [0, 1], sizes = [8, 1], strides = [1, 1]} : vector<8x4xf32> to vector<8x1xf32>
    %135 = vector.extract_strided_slice %126 {offsets = [1, 0], sizes = [1, 256], strides = [1, 1]} : vector<4x256xf32> to vector<1x256xf32>
    %136 = vector.broadcast %134 : vector<8x1xf32> to vector<8x256xf32>
    %137 = vector.broadcast %135 : vector<1x256xf32> to vector<8x256xf32>
    %138 = arith.mulf %136, %137 : vector<8x256xf32>
    %139 = arith.addf %133, %138 : vector<8x256xf32>
    %140 = vector.extract_strided_slice %0 {offsets = [0, 2], sizes = [8, 1], strides = [1, 1]} : vector<8x4xf32> to vector<8x1xf32>
    %141 = vector.extract_strided_slice %126 {offsets = [2, 0], sizes = [1, 256], strides = [1, 1]} : vector<4x256xf32> to vector<1x256xf32>
    %142 = vector.broadcast %140 : vector<8x1xf32> to vector<8x256xf32>
    %143 = vector.broadcast %141 : vector<1x256xf32> to vector<8x256xf32>
    %144 = arith.mulf %142, %143 : vector<8x256xf32>
    %145 = arith.addf %139, %144 : vector<8x256xf32>
    %146 = vector.extract_strided_slice %0 {offsets = [0, 3], sizes = [8, 1], strides = [1, 1]} : vector<8x4xf32> to vector<8x1xf32>
    %147 = vector.extract_strided_slice %126 {offsets = [3, 0], sizes = [1, 256], strides = [1, 1]} : vector<4x256xf32> to vector<1x256xf32>
    %148 = vector.broadcast %146 : vector<8x1xf32> to vector<8x256xf32>
    %149 = vector.broadcast %147 : vector<1x256xf32> to vector<8x256xf32>
    %150 = arith.mulf %148, %149 : vector<8x256xf32>
    %151 = arith.addf %145, %150 : vector<8x256xf32>
    %cst_43 = arith.constant 0.000000e+00 : f32
    %152 = vector.broadcast %cst_43 : f32 to vector<8x256xf32>
    %153 = arith.maximumf %151, %152 : vector<8x256xf32>
    %cst_44 = arith.constant dense<0.000000e+00> : vector<8xf32>
    %154 = vector.multi_reduction <add>, %153, %cst_44 [1] : vector<8x256xf32> to vector<8xf32>
    %155 = vector.shape_cast %154 : vector<8xf32> to vector<8x1xf32>
    %cst_45 = arith.constant 2.560000e+02 : f32
    %156 = vector.broadcast %cst_45 : f32 to vector<8x1xf32>
    %157 = arith.divf %155, %156 : vector<8x1xf32>
    %158 = vector.broadcast %157 : vector<8x1xf32> to vector<8x128xf32>
    %159 = arith.mulf %158, %2 : vector<8x128xf32>
    %cst_46 = arith.constant dense<0.000000e+00> : vector<128xf32>
    %160 = vector.multi_reduction <add>, %159, %cst_46 [0] : vector<8x128xf32> to vector<128xf32>
    %161 = vector.shape_cast %160 : vector<128xf32> to vector<1x128xf32>
    %162 = arith.addf %161, %3 : vector<1x128xf32>
    %cst_47 = arith.constant -1.000000e+30 : f32
    %163 = vector.broadcast %cst_47 : f32 to vector<1x128xf32>
    %164 = arith.select %6, %162, %163 : vector<1x128xi1>, vector<1x128xf32>
    %cst_48 = arith.constant dense<0xFF800000> : vector<1xf32>
    %165 = vector.multi_reduction <maximumf>, %164, %cst_48 [1] : vector<1x128xf32> to vector<1xf32>
    %166 = vector.shape_cast %165 : vector<1xf32> to vector<1x1xf32>
    %167 = vector.broadcast %166 : vector<1x1xf32> to vector<1x128xf32>
    %168 = arith.subf %164, %167 : vector<1x128xf32>
    %169 = math.exp %168 : vector<1x128xf32>
    %cst_49 = arith.constant dense<0.000000e+00> : vector<1xf32>
    %170 = vector.multi_reduction <add>, %169, %cst_49 [1] : vector<1x128xf32> to vector<1xf32>
    %171 = vector.shape_cast %170 : vector<1xf32> to vector<1x1xf32>
    %172 = vector.broadcast %171 : vector<1x1xf32> to vector<1x128xf32>
    %173 = arith.divf %169, %172 : vector<1x128xf32>
    %174 = vector.broadcast %124 : i32 to vector<1x128xi32>
    %175 = arith.cmpi eq, %4, %174 : vector<1x128xi32>
    %176 = arith.extui %175 : vector<1x128xi1> to vector<1x128xi32>
    %177 = arith.sitofp %176 : vector<1x128xi32> to vector<1x128xf32>
    %178 = vector.broadcast %177 : vector<1x128xf32> to vector<8x128xf32>
    %179 = arith.mulf %2, %178 : vector<8x128xf32>
    %cst_50 = arith.constant dense<0.000000e+00> : vector<8xf32>
    %180 = vector.multi_reduction <add>, %179, %cst_50 [1] : vector<8x128xf32> to vector<8xf32>
    %181 = vector.shape_cast %180 : vector<8xf32> to vector<8x1xf32>
    %cst_51 = arith.constant 3.906250e-03 : f32
    %182 = vector.broadcast %cst_51 : f32 to vector<8x1xf32>
    %183 = arith.mulf %181, %182 : vector<8x1xf32>
    %cst_52 = arith.constant 0.000000e+00 : f32
    %184 = vector.broadcast %cst_52 : f32 to vector<8x256xf32>
    %185 = arith.cmpf ogt, %151, %184 : vector<8x256xf32>
    %186 = arith.extui %185 : vector<8x256xi1> to vector<8x256xi32>
    %187 = arith.sitofp %186 : vector<8x256xi32> to vector<8x256xf32>
    %188 = vector.broadcast %183 : vector<8x1xf32> to vector<8x256xf32>
    %189 = arith.mulf %188, %187 : vector<8x256xf32>
    %190 = arith.mulf %189, %189 : vector<8x256xf32>
    %191 = arith.mulf %190, %189 : vector<8x256xf32>
    %cst_53 = arith.constant dense<0.000000e+00> : vector<8xf32>
    %192 = vector.multi_reduction <add>, %151, %cst_53 [1] : vector<8x256xf32> to vector<8xf32>
    %193 = vector.shape_cast %192 : vector<8xf32> to vector<8x1xf32>
    %cst_54 = arith.constant 2.000000e+00 : f32
    %194 = vector.broadcast %cst_54 : f32 to vector<8x256xf32>
    %195 = arith.mulf %194, %190 : vector<8x256xf32>
    %196 = vector.broadcast %193 : vector<8x1xf32> to vector<8x256xf32>
    %197 = arith.mulf %196, %191 : vector<8x256xf32>
    %198 = arith.addf %195, %197 : vector<8x256xf32>
    %cst_55 = arith.constant 9.99999997E-7 : f32
    %199 = vector.broadcast %cst_55 : f32 to vector<8x256xf32>
    %200 = arith.addf %198, %199 : vector<8x256xf32>
    %201 = arith.divf %190, %200 : vector<8x256xf32>
    %cst_56 = arith.constant 0.000000e+00 : f32
    %202 = vector.broadcast %cst_56 : f32 to vector<8x256xf32>
    %203 = arith.cmpf one, %189, %202 : vector<8x256xf32>
    %cst_57 = arith.constant 0.000000e+00 : f32
    %204 = vector.broadcast %cst_57 : f32 to vector<8x256xf32>
    %205 = arith.select %203, %201, %204 : vector<8x256xi1>, vector<8x256xf32>
    %cst_58 = arith.constant 0.000000e+00 : f32
    %206 = vector.broadcast %cst_58 : f32 to vector<8x256xf32>
    %207 = arith.maximumf %189, %206 : vector<8x256xf32>
    %208 = arith.mulf %207, %205 : vector<8x256xf32>
    %cst_59 = arith.constant dense<0.000000e+00> : vector<8xf32>
    %209 = vector.multi_reduction <add>, %208, %cst_59 [1] : vector<8x256xf32> to vector<8xf32>
    %210 = vector.shape_cast %209 : vector<8xf32> to vector<8x1xf32>
    %211 = vector.broadcast %210 : vector<8x1xf32> to vector<8x256xf32>
    %212 = arith.mulf %211, %151 : vector<8x256xf32>
    %cst_60 = arith.constant dense<0.000000e+00> : vector<256xf32>
    %213 = vector.multi_reduction <add>, %212, %cst_60 [0] : vector<8x256xf32> to vector<256xf32>
    %214 = vector.shape_cast %213 : vector<256xf32> to vector<1x256xf32>
    %cst_61 = arith.constant 0.000000e+00 : f32
    %215 = vector.broadcast %cst_61 : f32 to vector<1x256xf32>
    %216 = arith.maximumf %214, %215 : vector<1x256xf32>
    %cst_62 = arith.constant dense<0x7F800000> : vector<1xf32>
    %217 = vector.multi_reduction <minimumf>, %216, %cst_62 [1] : vector<1x256xf32> to vector<1xf32>
    %218 = vector.shape_cast %217 : vector<1xf32> to vector<1x1xf32>
    %219 = vector.broadcast %218 : vector<1x1xf32> to vector<1x256xf32>
    %220 = arith.subf %216, %219 : vector<1x256xf32>
    %cst_63 = arith.constant dense<0xFF800000> : vector<1xf32>
    %221 = vector.multi_reduction <maximumf>, %220, %cst_63 [1] : vector<1x256xf32> to vector<1xf32>
    %222 = vector.shape_cast %221 : vector<1xf32> to vector<1x1xf32>
    %cst_64 = arith.constant 1.000000e-07 : f32
    %223 = vector.broadcast %cst_64 : f32 to vector<1x1xf32>
    %224 = arith.addf %223, %222 : vector<1x1xf32>
    %225 = vector.broadcast %224 : vector<1x1xf32> to vector<1x256xf32>
    %226 = arith.divf %220, %225 : vector<1x256xf32>
    %cst_65 = arith.constant 0.000000e+00 : f32
    %227 = vector.broadcast %cst_65 : f32 to vector<1x256xf32>
    %228 = arith.maximumf %226, %227 : vector<1x256xf32>
    %cst_66 = arith.constant dense<0x7F800000> : vector<1xf32>
    %229 = vector.multi_reduction <minimumf>, %228, %cst_66 [1] : vector<1x256xf32> to vector<1xf32>
    %230 = vector.shape_cast %229 : vector<1xf32> to vector<1x1xf32>
    %231 = vector.broadcast %230 : vector<1x1xf32> to vector<1x256xf32>
    %232 = arith.subf %228, %231 : vector<1x256xf32>
    %cst_67 = arith.constant dense<0xFF800000> : vector<1xf32>
    %233 = vector.multi_reduction <maximumf>, %232, %cst_67 [1] : vector<1x256xf32> to vector<1xf32>
    %234 = vector.shape_cast %233 : vector<1xf32> to vector<1x1xf32>
    %cst_68 = arith.constant 1.000000e-07 : f32
    %235 = vector.broadcast %cst_68 : f32 to vector<1x1xf32>
    %236 = arith.addf %235, %234 : vector<1x1xf32>
    %237 = vector.broadcast %236 : vector<1x1xf32> to vector<1x256xf32>
    %238 = arith.divf %232, %237 : vector<1x256xf32>
    %c1_69 = arith.constant 1 : index
    %c0_70 = arith.constant 0 : index
    %239 = vector.load %arg7[%c1_69, %c0_70] : memref<2x256xf32, #tpu.memory_space<vmem>>, vector<1x256xf32>
    tpu.vector_store %arg7[%c1_69, %c0_70], %238 {strides = array<i32>} : memref<2x256xf32, #tpu.memory_space<vmem>>, vector<1x256xf32>,
    %c1_71 = arith.constant 1 : index
    %c0_72 = arith.constant 0 : index
    %240 = vector.load %arg8[%c1_71, %c0_72] : memref<2x128xf32, #tpu.memory_space<vmem>>, vector<1x128xf32>
    tpu.vector_store %arg8[%c1_71, %c0_72], %173 {strides = array<i32>} : memref<2x128xf32, #tpu.memory_space<vmem>>, vector<1x128xf32>,
    return
  }
  func.func @transform_0(%arg0: i32, %arg1: memref<2xi32, #tpu.memory_space<smem>>) -> (i32, i32, i32) {
    %c0_i32 = arith.constant 0 : i32
    %c0_i32_0 = arith.constant 0 : i32
    %c0_i32_1 = arith.constant 0 : i32
    %c0_i32_2 = arith.constant 0 : i32
    return %c0_i32, %c0_i32_0, %c0_i32_1 : i32, i32, i32
  }
  func.func @transform_1(%arg0: i32, %arg1: memref<2xi32, #tpu.memory_space<smem>>) -> (i32, i32) {
    %c0_i32 = arith.constant 0 : i32
    %c0_i32_0 = arith.constant 0 : i32
    %c0_i32_1 = arith.constant 0 : i32
    return %c0_i32, %c0_i32_0 : i32, i32
  }
  func.func @transform_2(%arg0: i32, %arg1: memref<2xi32, #tpu.memory_space<smem>>) -> (i32, i32) {
    %c0_i32 = arith.constant 0 : i32
    %c0_i32_0 = arith.constant 0 : i32
    %c0_i32_1 = arith.constant 0 : i32
    return %c0_i32, %c0_i32_0 : i32, i32
  }
  func.func @transform_3(%arg0: i32, %arg1: memref<2xi32, #tpu.memory_space<smem>>) -> (i32, i32) {
    %c0_i32 = arith.constant 0 : i32
    %c0_i32_0 = arith.constant 0 : i32
    %c0_i32_1 = arith.constant 0 : i32
    return %c0_i32, %c0_i32_0 : i32, i32
  }
  func.func @transform_4(%arg0: i32, %arg1: memref<2xi32, #tpu.memory_space<smem>>) -> (i32, i32) {
    %c0_i32 = arith.constant 0 : i32
    %c0_i32_0 = arith.constant 0 : i32
    %c0_i32_1 = arith.constant 0 : i32
    return %c0_i32, %c0_i32_0 : i32, i32
  }
  func.func @transform_5(%arg0: i32, %arg1: memref<2xi32, #tpu.memory_space<smem>>) -> (i32, i32) {
    %c0_i32 = arith.constant 0 : i32
    %c0_i32_0 = arith.constant 0 : i32
    %c0_i32_1 = arith.constant 0 : i32
    return %c0_i32, %c0_i32_0 : i32, i32
  }
  func.func @transform_6(%arg0: i32, %arg1: memref<2xi32, #tpu.memory_space<smem>>) -> (i32, i32) {
    %c0_i32 = arith.constant 0 : i32
    %c0_i32_0 = arith.constant 0 : i32
    %c0_i32_1 = arith.constant 0 : i32
    return %c0_i32, %c0_i32_0 : i32, i32
  }
}

</mosaic_0001>

<llo_original>
// kernel: tpu_custom_call.1
$region0: #{tpu_custom_call.1}
  #allocation0 [shape = 'u32[]', space=smem, size = 0x4, offset = 0x4, fixed_abs, tag = 'smem constant byte address 0x4 - core index']
  #allocation1 [shape = 'u32[144,128]{1,0:T(1,128)}', space=vmem, size = 0x12000, scoped, tag = 'internal scratch']
  #allocation2 [shape = 's32[1]{0}', space=sflag, size = 0x4, scoped, tag = 'scoped memory for tpu_custom_call.1']
  #allocation3 [shape = 'u8[512]{0}', space=smem, size = 0x200, scoped, tag = 'prefetched SMEM operand 0']
  %s0 = inlined_call_operand.hbm [shape: s32[2], index: 0, kind: input, shape index: {}]
  %s1 = inlined_call_operand.vmem [shape: f32[2,4,256], index: 1, kind: input, shape index: {}]
  %s2 = inlined_call_operand.vmem [shape: f32[8,4], index: 2, kind: input, shape index: {}]
  %s3 = inlined_call_operand.vmem [shape: f32[8,1], index: 3, kind: input, shape index: {}]
  %s4 = inlined_call_operand.vmem [shape: f32[8,128], index: 4, kind: input, shape index: {}]
  %s5 = inlined_call_operand.vmem [shape: f32[1,128], index: 5, kind: input, shape index: {}]
  %s6 = inlined_call_operand.hbm [shape: f32[2,256], index: 6, kind: output, shape index: {0}]
  %s7 = inlined_call_operand.hbm [shape: f32[2,128], index: 7, kind: output, shape index: {1}]
  %8 = xla_tuple %s6, %s7
  %s9 = sld [smem:[#allocation0]]
  $region38: #{tpu_custom_call.1} parent=0
    _
  %s11 = ssub.s32 1, %s9
  %s12 = scalar_select 0, %s11, %s9
  %14 = dma.hbm_to_smem %s0, 16, [#allocation3], [#allocation2]
  %15 = dma.done [#allocation2], 16
  %16 = sfence
  $region1: #{tpu_custom_call.1} parent=0
    #allocation4 [shape = 'u8[2048]{0}', space=vmem, size = 0x800, scoped, tag = 'output window, operand 0, single buffered']
    #allocation5 [shape = 's32[1]{0}', space=sflag, size = 0x4, scoped, tag = 'scoped memory for tpu_custom_call.1']
    #allocation6 [shape = 'u8[1024]{0}', space=vmem, size = 0x400, scoped, tag = 'output window, operand 1, single buffered']
    #allocation7 [shape = 's32[1]{0}', space=sflag, size = 0x4, scoped, tag = 'scoped memory for tpu_custom_call.1']
    %17 = vsyncpa [#allocation5], 0
    %18 = vsyncpa [#allocation7], 0
    // Predicated region
    $region2: #{tpu_custom_call.1} parent=1 // pred_check
      _
    $region3: #{tpu_custom_call.1} parent=1 // pred_check_branch
      %20 = sbr.rel (0) target = $region5
    $region4: #{tpu_custom_call.1} parent=1 // pred_region
      _
    $region5: #{tpu_custom_call.1} parent=1 // pred_fallthru
      _
    // Predicated region
    $region6: #{tpu_custom_call.1} parent=1 // pred_check
      _
    $region7: #{tpu_custom_call.1} parent=1 // pred_check_branch
      %22 = sbr.rel (0) target = $region9
    $region8: #{tpu_custom_call.1} parent=1 // pred_region
      _
    $region9: #{tpu_custom_call.1} parent=1 // pred_fallthru
      _
    // Predicated region
    $region10: #{tpu_custom_call.1} parent=1 // pred_check
      _
    $region11: #{tpu_custom_call.1} parent=1 // pred_check_branch
      %24 = sbr.rel (0) target = $region13
    $region12: #{tpu_custom_call.1} parent=1 // pred_region
      _
    $region13: #{tpu_custom_call.1} parent=1 // pred_fallthru
      _
    // Predicated region
    $region14: #{tpu_custom_call.1} parent=1 // pred_check
      _
    $region15: #{tpu_custom_call.1} parent=1 // pred_check_branch
      %26 = sbr.rel (0) target = $region17
    $region16: #{tpu_custom_call.1} parent=1 // pred_region
      _
    $region17: #{tpu_custom_call.1} parent=1 // pred_fallthru
      _
    // Predicated region
    $region18: #{tpu_custom_call.1} parent=1 // pred_check
      _
    $region19: #{tpu_custom_call.1} parent=1 // pred_check_branch
      %28 = sbr.rel (0) target = $region21
    $region20: #{tpu_custom_call.1} parent=1 // pred_region
      _
    $region21: #{tpu_custom_call.1} parent=1 // pred_fallthru
      _
    %v29 = vld [vmem:[%s2] sm:$0xff]
    %v30 = vld [vmem:[%s3] sm:$0xff]
    %v31 = vld [vmem:[%s4] sm:$0xff]
    %v32 = vld [vmem:[%s5] sm:$0x1]
    %v33 = vlaneseq
    %v34 = vand.u32 %v33, 127
    %vm35 = vcmp.lt.s32.totalorder %v34, 10
    %s36 = sld [smem:[#allocation3]]
    %v37 = vld [vmem:[%s1] sm:$0xff]
    %39 = vset.pattern.permute.xlu0 0
    %40 = vperm.xlu0 %39, %v29
    %v41 = vpop.permute.xlu0 %40
    %v44 = vlaneseq
    %v45 = vshrl.u32 %v44, 7
    %v46 = vsub.s32 0, %v45
    %v47 = vrot.slane %v37, %v46
    %v48 = vlaneseq
    %v49 = vshrl.u32 %v48, 7
    %v50 = vsub.s32 4, %v49
    %v51 = vrot.slane %v37, %v50
    %v54 = vlaneseq
    %v55 = vshrl.u32 %v54, 7
    %v56 = vsub.s32 0, %v55
    %v57 = vrot.slane %v47, %v56
    %v58 = vlaneseq
    %v59 = vshrl.u32 %v58, 7
    %v60 = vsub.s32 0, %v59
    %v61 = vrot.slane %v51, %v60
    %v62 = vmul.f32 %v41, %v57
    %v63 = vmul.f32 %v41, %v61
    %65 = vset.pattern.permute.xlu0 0
    %66 = vperm.xlu0 %65, %v30
    %v67 = vpop.permute.xlu0 %66
    %v69 = vadd.f32 %v67, %v62
    %v70 = vadd.f32 %v67, %v63
    %71 = vset.pattern.permute.xlu0 1
    %72 = vperm.xlu0 %71, %v29
    %v73 = vpop.permute.xlu0 %72
    %v75 = vlaneseq
    %v76 = vshrl.u32 %v75, 7
    %v77 = vsub.s32 1, %v76
    %v78 = vrot.slane %v37, %v77
    %v79 = vlaneseq
    %v80 = vshrl.u32 %v79, 7
    %v81 = vsub.s32 5, %v80
    %v82 = vrot.slane %v37, %v81
    %v85 = vlaneseq
    %v86 = vshrl.u32 %v85, 7
    %v87 = vsub.s32 1, %v86
    %v88 = vrot.slane %v78, %v87
    %v89 = vlaneseq
    %v90 = vshrl.u32 %v89, 7
    %v91 = vsub.s32 1, %v90
    %v92 = vrot.slane %v82, %v91
    %v93 = vmul.f32 %v73, %v88
    %v94 = vmul.f32 %v73, %v92
    %v95 = vadd.f32 %v69, %v93
    %v96 = vadd.f32 %v70, %v94
    %97 = vset.pattern.permute.xlu0 2
    %98 = vperm.xlu0 %97, %v29
    %v99 = vpop.permute.xlu0 %98
    %v101 = vlaneseq
    %v102 = vshrl.u32 %v101, 7
    %v103 = vsub.s32 2, %v102
    %v104 = vrot.slane %v37, %v103
    %v105 = vlaneseq
    %v106 = vshrl.u32 %v105, 7
    %v107 = vsub.s32 6, %v106
    %v108 = vrot.slane %v37, %v107
    %v111 = vlaneseq
    %v112 = vshrl.u32 %v111, 7
    %v113 = vsub.s32 2, %v112
    %v114 = vrot.slane %v104, %v113
    %v115 = vlaneseq
    %v116 = vshrl.u32 %v115, 7
    %v117 = vsub.s32 2, %v116
    %v118 = vrot.slane %v108, %v117
    %v119 = vmul.f32 %v99, %v114
    %v120 = vmul.f32 %v99, %v118
    %v121 = vadd.f32 %v95, %v119
    %v122 = vadd.f32 %v96, %v120
    %123 = vset.pattern.permute.xlu0 3
    %124 = vperm.xlu0 %123, %v29
    %v125 = vpop.permute.xlu0 %124
    %v127 = vlaneseq
    %v128 = vshrl.u32 %v127, 7
    %v129 = vsub.s32 3, %v128
    %v130 = vrot.slane %v37, %v129
    %v131 = vlaneseq
    %v132 = vshrl.u32 %v131, 7
    %v133 = vsub.s32 7, %v132
    %v134 = vrot.slane %v37, %v133
    %v137 = vlaneseq
    %v138 = vshrl.u32 %v137, 7
    %v139 = vsub.s32 3, %v138
    %v140 = vrot.slane %v130, %v139
    %v141 = vlaneseq
    %v142 = vshrl.u32 %v141, 7
    %v143 = vsub.s32 3, %v142
    %v144 = vrot.slane %v134, %v143
    %v145 = vmul.f32 %v125, %v140
    %v146 = vmul.f32 %v125, %v144
    %v147 = vadd.f32 %v121, %v145
    %v148 = vadd.f32 %v122, %v146
    %v149 = vmax.f32 %v147, 0.0
    %v150 = vmax.f32 %v148, 0.0
    %v151 = vadd.f32 %v149, %v150
    %152 = vadd.xlane.f32.xlu0 %v151
    %v153 = vpop.xlane.xlu0 %152
    %v154 = vrcp.pop 256.0
    %v155 = vmul.f32 %v153, %v154
    %v156 = vmul.f32 %v155, %v31
    %v157 = vrot.slane %v156, 4
    %v158 = vadd.f32 %v156, %v157
    %v159 = vrot.slane %v158, 2
    %v160 = vadd.f32 %v158, %v159
    %v161 = vrot.slane %v160, 1
    %v162 = vadd.f32 %v160, %v161
    %v163 = vadd.f32 %v162, %v32
    %v164 = vsel %vm35, %v163, -1e+30
    %vm165 = vcmask 1040384
    %v166 = vsel %vm165, %v164, -inf
    %167 = vmax.xlane.f32.xlu0 %v166
    %v168 = vpop.xlane.xlu0 %167
    %v169 = vsub.f32 %v164, %v168
    %v170 = vmul.f32 %v169, 1.442695
    %v171 = vpow.pop %v170
    %v172 = vsel %vm165, %v171, 0.0
    %173 = vadd.xlane.f32.xlu0 %v172
    %v174 = vpop.xlane.xlu0 %173
    %v175 = vrcp.pop %v174
    %v176 = vmul.f32 %v171, %v175
    %v177 = vstv %s36
    %vm178 = vcmp.eq.s32.totalorder %v34, %v177
    %v179 = vsel %vm178, 1, 0
    %v180 = vcvt.s32.f32 %v179
    %v181 = vmul.f32 %v31, %v180
    %182 = vadd.xlane.f32.xlu0 %v181
    %v183 = vpop.xlane.xlu0 %182
    %v184 = vmul.f32 %v183, 0.00390625
    %vm185 = vcmp.gt.f32.partialorder %v147, 0.0
    %vm186 = vcmp.gt.f32.partialorder %v148, 0.0
    %v187 = vsel %vm185, 1, 0
    %v188 = vsel %vm186, 1, 0
    %v189 = vcvt.s32.f32 %v187
    %v190 = vcvt.s32.f32 %v188
    %v191 = vmul.f32 %v184, %v189
    %v192 = vmul.f32 %v184, %v190
    %v193 = vmul.f32 %v191, %v191
    %v194 = vmul.f32 %v192, %v192
    %v195 = vmul.f32 %v193, %v191
    %v196 = vmul.f32 %v194, %v192
    %v197 = vadd.f32 %v147, %v148
    %198 = vadd.xlane.f32.xlu0 %v197
    %v199 = vpop.xlane.xlu0 %198
    %v200 = vmul.f32 %v193, 2.0
    %v201 = vmul.f32 %v194, 2.0
    %v202 = vmul.f32 %v199, %v195
    %v203 = vmul.f32 %v199, %v196
    %v204 = vadd.f32 %v200, %v202
    %v205 = vadd.f32 %v201, %v203
    %v206 = vadd.f32 %v204, 1e-06
    %v207 = vadd.f32 %v205, 1e-06
    %v208 = vrcp.pop %v206
    %v209 = vmul.f32 %v193, %v208
    %v210 = vrcp.pop %v207
    %v211 = vmul.f32 %v194, %v210
    %vm212 = vcmp.ne.f32.partialorder %v191, 0.0
    %vm213 = vcmp.ne.f32.partialorder %v192, 0.0
    %v214 = vsel %vm212, %v209, 0.0
    %v215 = vsel %vm213, %v211, 0.0
    %v216 = vmax.f32 %v191, 0.0
    %v217 = vmax.f32 %v192, 0.0
    %v218 = vmul.f32 %v216, %v214
    %v219 = vmul.f32 %v217, %v215
    %v220 = vadd.f32 %v218, %v219
    %221 = vadd.xlane.f32.xlu0 %v220
    %v222 = vpop.xlane.xlu0 %221
    %v223 = vmul.f32 %v222, %v147
    %v224 = vmul.f32 %v222, %v148
    %v225 = vrot.slane %v223, 4
    %v226 = vadd.f32 %v223, %v225
    %v227 = vrot.slane %v226, 2
    %v228 = vadd.f32 %v226, %v227
    %v229 = vrot.slane %v228, 1
    %v230 = vadd.f32 %v228, %v229
    %v231 = vrot.slane %v224, 4
    %v232 = vadd.f32 %v224, %v231
    %v233 = vrot.slane %v232, 2
    %v234 = vadd.f32 %v232, %v233
    %v235 = vrot.slane %v234, 1
    %v236 = vadd.f32 %v234, %v235
    %v237 = vmax.f32 %v230, 0.0
    %v238 = vmax.f32 %v236, 0.0
    %v239 = vmin.f32 %v237, %v238
    %240 = vmin.xlane.f32.xlu0 %v239
    %v241 = vpop.xlane.xlu0 %240
    %v242 = vsub.f32 %v237, %v241
    %v243 = vsub.f32 %v238, %v241
    %v244 = vmax.f32 %v242, %v243
    %245 = vmax.xlane.f32.xlu0 %v244
    %v246 = vpop.xlane.xlu0 %245
    %v247 = vadd.f32 %v246, 1e-07
    %v248 = vrcp.pop %v247
    %v249 = vmul.f32 %v242, %v248
    %v250 = vmul.f32 %v243, %v248
    %v251 = vmax.f32 %v249, 0.0
    %v252 = vmax.f32 %v250, 0.0
    %v253 = vmin.f32 %v251, %v252
    %254 = vmin.xlane.f32.xlu0 %v253
    %v255 = vpop.xlane.xlu0 %254
    %v256 = vsub.f32 %v251, %v255
    %v257 = vsub.f32 %v252, %v255
    %v258 = vmax.f32 %v256, %v257
    %259 = vmax.xlane.f32.xlu0 %v258
    %v260 = vpop.xlane.xlu0 %259
    %v261 = vadd.f32 %v260, 1e-07
    %v262 = vrcp.pop %v261
    %v263 = vmul.f32 %v256, %v262
    %v264 = vmul.f32 %v257, %v262
    %v267 = vcombine.low %v263, %v264
    %v269 = vunpack.c.l.s4 1966171168
    %v270 = vunpack.c.0.s8 %v269
    %v271 = vlaneseq
    %v272 = vshrl.u32 %v271, 7
    %v273 = vsub.s32 %v270, %v272
    %v274 = vrot.slane %v267, %v273
    %v276 = vunpack.c.l.s4 1966171168
    %v277 = vunpack.c.0.s8 %v276
    %v278 = vlaneseq
    %v279 = vshrl.u32 %v278, 7
    %v280 = vsub.s32 %v277, %v279
    %v281 = vrot.slane %v274, %v280
    %v283 = vlaneseq
    %vm284 = vcmp.ge.s32.totalorder %v283, 0
    %vm285 = vcmp.lt.s32.totalorder %v283, 256
    %vm286 = vmand %vm284, %vm285
    %287 = vst.msk [vmem:[#allocation4] ss:$2 sm:$0x3] %vm286, %v281
    %288 = vst [vmem:[#allocation6] sm:$0x1] %v176
    %s289 = sld [smem:[#allocation3 + $0x1]]
    %s290 = scalar_lea.vmem %s1, 8
    %v291 = vld [vmem:[%s290] sm:$0xff]
    %v293 = vlaneseq
    %v294 = vshrl.u32 %v293, 7
    %v295 = vsub.s32 0, %v294
    %v296 = vrot.slane %v291, %v295
    %v297 = vlaneseq
    %v298 = vshrl.u32 %v297, 7
    %v299 = vsub.s32 4, %v298
    %v300 = vrot.slane %v291, %v299
    %v303 = vlaneseq
    %v304 = vshrl.u32 %v303, 7
    %v305 = vsub.s32 0, %v304
    %v306 = vrot.slane %v296, %v305
    %v307 = vlaneseq
    %v308 = vshrl.u32 %v307, 7
    %v309 = vsub.s32 0, %v308
    %v310 = vrot.slane %v300, %v309
    %v311 = vmul.f32 %v41, %v306
    %v312 = vmul.f32 %v41, %v310
    %v313 = vadd.f32 %v67, %v311
    %v314 = vadd.f32 %v67, %v312
    %v315 = vlaneseq
    %v316 = vshrl.u32 %v315, 7
    %v317 = vsub.s32 1, %v316
    %v318 = vrot.slane %v291, %v317
    %v319 = vlaneseq
    %v320 = vshrl.u32 %v319, 7
    %v321 = vsub.s32 5, %v320
    %v322 = vrot.slane %v291, %v321
    %v325 = vlaneseq
    %v326 = vshrl.u32 %v325, 7
    %v327 = vsub.s32 1, %v326
    %v328 = vrot.slane %v318, %v327
    %v329 = vlaneseq
    %v330 = vshrl.u32 %v329, 7
    %v331 = vsub.s32 1, %v330
    %v332 = vrot.slane %v322, %v331
    %v333 = vmul.f32 %v73, %v328
    %v334 = vmul.f32 %v73, %v332
    %v335 = vadd.f32 %v313, %v333
    %v336 = vadd.f32 %v314, %v334
    %v337 = vlaneseq
    %v338 = vshrl.u32 %v337, 7
    %v339 = vsub.s32 2, %v338
    %v340 = vrot.slane %v291, %v339
    %v341 = vlaneseq
    %v342 = vshrl.u32 %v341, 7
    %v343 = vsub.s32 6, %v342
    %v344 = vrot.slane %v291, %v343
    %v347 = vlaneseq
    %v348 = vshrl.u32 %v347, 7
    %v349 = vsub.s32 2, %v348
    %v350 = vrot.slane %v340, %v349
    %v351 = vlaneseq
    %v352 = vshrl.u32 %v351, 7
    %v353 = vsub.s32 2, %v352
    %v354 = vrot.slane %v344, %v353
    %v355 = vmul.f32 %v99, %v350
    %v356 = vmul.f32 %v99, %v354
    %v357 = vadd.f32 %v335, %v355
    %v358 = vadd.f32 %v336, %v356
    %v359 = vlaneseq
    %v360 = vshrl.u32 %v359, 7
    %v361 = vsub.s32 3, %v360
    %v362 = vrot.slane %v291, %v361
    %v363 = vlaneseq
    %v364 = vshrl.u32 %v363, 7
    %v365 = vsub.s32 7, %v364
    %v366 = vrot.slane %v291, %v365
    %v369 = vlaneseq
    %v370 = vshrl.u32 %v369, 7
    %v371 = vsub.s32 3, %v370
    %v372 = vrot.slane %v362, %v371
    %v373 = vlaneseq
    %v374 = vshrl.u32 %v373, 7
    %v375 = vsub.s32 3, %v374
    %v376 = vrot.slane %v366, %v375
    %v377 = vmul.f32 %v125, %v372
    %v378 = vmul.f32 %v125, %v376
    %v379 = vadd.f32 %v357, %v377
    %v380 = vadd.f32 %v358, %v378
    %v381 = vmax.f32 %v379, 0.0
    %v382 = vmax.f32 %v380, 0.0
    %v383 = vadd.f32 %v381, %v382
    %384 = vadd.xlane.f32.xlu0 %v383
    %v385 = vpop.xlane.xlu0 %384
    %v386 = vmul.f32 %v385, %v154
    %v387 = vmul.f32 %v386, %v31
    %v388 = vrot.slane %v387, 4
    %v389 = vadd.f32 %v387, %v388
    %v390 = vrot.slane %v389, 2
    %v391 = vadd.f32 %v389, %v390
    %v392 = vrot.slane %v391, 1
    %v393 = vadd.f32 %v391, %v392
    %v394 = vadd.f32 %v393, %v32
    %v395 = vsel %vm35, %v394, -1e+30
    %v396 = vsel %vm165, %v395, -inf
    %397 = vmax.xlane.f32.xlu0 %v396
    %v398 = vpop.xlane.xlu0 %397
    %v399 = vsub.f32 %v395, %v398
    %v400 = vmul.f32 %v399, 1.442695
    %v401 = vpow.pop %v400
    %v402 = vsel %vm165, %v401, 0.0
    %403 = vadd.xlane.f32.xlu0 %v402
    %v404 = vpop.xlane.xlu0 %403
    %v405 = vrcp.pop %v404
    %v406 = vmul.f32 %v401, %v405
    %v407 = vstv %s289
    %vm408 = vcmp.eq.s32.totalorder %v34, %v407
    %v409 = vsel %vm408, 1, 0
    %v410 = vcvt.s32.f32 %v409
    %v411 = vmul.f32 %v31, %v410
    %412 = vadd.xlane.f32.xlu0 %v411
    %v413 = vpop.xlane.xlu0 %412
    %v414 = vmul.f32 %v413, 0.00390625
    %vm415 = vcmp.gt.f32.partialorder %v379, 0.0
    %vm416 = vcmp.gt.f32.partialorder %v380, 0.0
    %v417 = vsel %vm415, 1, 0
    %v418 = vsel %vm416, 1, 0
    %v419 = vcvt.s32.f32 %v417
    %v420 = vcvt.s32.f32 %v418
    %v421 = vmul.f32 %v414, %v419
    %v422 = vmul.f32 %v414, %v420
    %v423 = vmul.f32 %v421, %v421
    %v424 = vmul.f32 %v422, %v422
    %v425 = vmul.f32 %v423, %v421
    %v426 = vmul.f32 %v424, %v422
    %v427 = vadd.f32 %v379, %v380
    %428 = vadd.xlane.f32.xlu0 %v427
    %v429 = vpop.xlane.xlu0 %428
    %v430 = vmul.f32 %v423, 2.0
    %v431 = vmul.f32 %v424, 2.0
    %v432 = vmul.f32 %v429, %v425
    %v433 = vmul.f32 %v429, %v426
    %v434 = vadd.f32 %v430, %v432
    %v435 = vadd.f32 %v431, %v433
    %v436 = vadd.f32 %v434, 1e-06
    %v437 = vadd.f32 %v435, 1e-06
    %v438 = vrcp.pop %v436
    %v439 = vmul.f32 %v423, %v438
    %v440 = vrcp.pop %v437
    %v441 = vmul.f32 %v424, %v440
    %vm442 = vcmp.ne.f32.partialorder %v421, 0.0
    %vm443 = vcmp.ne.f32.partialorder %v422, 0.0
    %v444 = vsel %vm442, %v439, 0.0
    %v445 = vsel %vm443, %v441, 0.0
    %v446 = vmax.f32 %v421, 0.0
    %v447 = vmax.f32 %v422, 0.0
    %v448 = vmul.f32 %v446, %v444
    %v449 = vmul.f32 %v447, %v445
    %v450 = vadd.f32 %v448, %v449
    %451 = vadd.xlane.f32.xlu0 %v450
    %v452 = vpop.xlane.xlu0 %451
    %v453 = vmul.f32 %v452, %v379
    %v454 = vmul.f32 %v452, %v380
    %v455 = vrot.slane %v453, 4
    %v456 = vadd.f32 %v453, %v455
    %v457 = vrot.slane %v456, 2
    %v458 = vadd.f32 %v456, %v457
    %v459 = vrot.slane %v458, 1
    %v460 = vadd.f32 %v458, %v459
    %v461 = vrot.slane %v454, 4
    %v462 = vadd.f32 %v454, %v461
    %v463 = vrot.slane %v462, 2
    %v464 = vadd.f32 %v462, %v463
    %v465 = vrot.slane %v464, 1
    %v466 = vadd.f32 %v464, %v465
    %v467 = vmax.f32 %v460, 0.0
    %v468 = vmax.f32 %v466, 0.0
    %v469 = vmin.f32 %v467, %v468
    %470 = vmin.xlane.f32.xlu0 %v469
    %v471 = vpop.xlane.xlu0 %470
    %v472 = vsub.f32 %v467, %v471
    %v473 = vsub.f32 %v468, %v471
    %v474 = vmax.f32 %v472, %v473
    %475 = vmax.xlane.f32.xlu0 %v474
    %v476 = vpop.xlane.xlu0 %475
    %v477 = vadd.f32 %v476, 1e-07
    %v478 = vrcp.pop %v477
    %v479 = vmul.f32 %v472, %v478
    %v480 = vmul.f32 %v473, %v478
    %v481 = vmax.f32 %v479, 0.0
    %v482 = vmax.f32 %v480, 0.0
    %v483 = vmin.f32 %v481, %v482
    %484 = vmin.xlane.f32.xlu0 %v483
    %v485 = vpop.xlane.xlu0 %484
    %v486 = vsub.f32 %v481, %v485
    %v487 = vsub.f32 %v482, %v485
    %v488 = vmax.f32 %v486, %v487
    %489 = vmax.xlane.f32.xlu0 %v488
    %v490 = vpop.xlane.xlu0 %489
    %v491 = vadd.f32 %v490, 1e-07
    %v492 = vrcp.pop %v491
    %v493 = vmul.f32 %v486, %v492
    %v494 = vmul.f32 %v487, %v492
    %v497 = vcombine.low %v493, %v494
    %v499 = vunpack.c.l.s4 1966171168
    %v500 = vunpack.c.0.s8 %v499
    %v501 = vlaneseq
    %v502 = vshrl.u32 %v501, 7
    %v503 = vsub.s32 %v500, %v502
    %v504 = vrot.slane %v497, %v503
    %v506 = vunpack.c.l.s4 1966171168
    %v507 = vunpack.c.0.s8 %v506
    %v508 = vlaneseq
    %v509 = vshrl.u32 %v508, 7
    %v510 = vsub.s32 %v507, %v509
    %v511 = vrot.slane %v504, %v510
    %s513 = scalar_lea.vmem [#allocation4], 1
    %514 = vst.msk [vmem:[%s513] ss:$2 sm:$0x3] %vm286, %v511
    %515 = vst [vmem:[#allocation6 + $0x1] sm:$0x1] %v406
    // Predicated region
    $region22: #{tpu_custom_call.1} parent=1 // pred_check
      _
    $region23: #{tpu_custom_call.1} parent=1 // pred_check_branch
      %517 = sbr.rel (0) target = $region25
    $region24: #{tpu_custom_call.1} parent=1 // pred_region
      %s519 = ssub.s32 64, 64
      %520 = vsyncadd [#allocation5], %s519
      %s522 = sshll.u32 [#allocation4], 4
      %s523 = int_to_ptr.vmem [resolvable:$true] %s522
      %525 = dma.vmem_to_hbm [thread:$0]  %s523, 64, %s6, [#allocation5]
    $region25: #{tpu_custom_call.1} parent=1 // pred_fallthru
      _
    // Predicated region
    $region26: #{tpu_custom_call.1} parent=1 // pred_check
      _
    $region27: #{tpu_custom_call.1} parent=1 // pred_check_branch
      %527 = sbr.rel (0) target = $region29
    $region28: #{tpu_custom_call.1} parent=1 // pred_region
      %s529 = ssub.s32 32, 32
      %530 = vsyncadd [#allocation7], %s529
      %s532 = sshll.u32 [#allocation6], 4
      %s533 = int_to_ptr.vmem [resolvable:$true] %s532
      %535 = dma.vmem_to_hbm [thread:$0]  %s533, 32, %s7, [#allocation7]
    $region29: #{tpu_custom_call.1} parent=1 // pred_fallthru
      _
    // Predicated region
    $region30: #{tpu_custom_call.1} parent=1 // pred_check
      _
    $region31: #{tpu_custom_call.1} parent=1 // pred_check_branch
      %537 = sbr.rel (0) target = $region33
    $region32: #{tpu_custom_call.1} parent=1 // pred_region
      %538 = dma.done [#allocation5], 64
    $region33: #{tpu_custom_call.1} parent=1 // pred_fallthru
      _
    // Predicated region
    $region34: #{tpu_custom_call.1} parent=1 // pred_check
      _
    $region35: #{tpu_custom_call.1} parent=1 // pred_check_branch
      %540 = sbr.rel (0) target = $region37
    $region36: #{tpu_custom_call.1} parent=1 // pred_region
      %541 = dma.done [#allocation7], 32
    $region37: #{tpu_custom_call.1} parent=1 // pred_fallthru
      _
    %542 = vsyncpa [#allocation5], 1
    %543 = vsyncpa [#allocation7], 1

</llo_original>
